<compile_context>
chip_gen: v7x
topology: tpu7x:2x2x1
jax: 0.10.0
libtpu: 0.0.40
codegen_flags: <defaults>
</compile_context>

<pallas_src>
import functools

import jax
import jax.numpy as jnp
from jax.experimental import pallas as pl
from jax.experimental.pallas import tpu as pltpu

LN_EPS = 1e-5


def _neighbor_emb_kernel(z_ref, mask_ref, s_ref, w_ref, gamma_ref, beta_ref,
                         out_ref, *, use_bf16_matmul):
    # Block shapes:
    #   z    (BBLK, N, 1) int32
    #   mask (BBLK, N, N) f32
    #   s    (BBLK, N, H) f32
    #   w    (MAX_Z, H)   f32   (whole embedding table, resident)
    #   gamma/beta (1, H) f32
    #   out  (BBLK, N, H) f32
    bblk, n, _ = z_ref.shape
    max_z, h = w_ref.shape
    bn = bblk * n

    w = w_ref[...]
    gamma = gamma_ref[...]                                          # (1, H)
    beta = beta_ref[...]                                            # (1, H)

    # --- fused embedding gather for the WHOLE block: one-hot(z) @ W on the MXU ---
    z_flat = z_ref[...].reshape(bn, 1)                              # (BN, 1) int32
    iota = jax.lax.broadcasted_iota(jnp.int32, (bn, max_z), 1)      # (BN, MAX_Z)
    onehot = (z_flat == iota).astype(w.dtype)                       # exact select
    emb = jnp.dot(onehot, w, preferred_element_type=jnp.float32)    # (BN, H)

    # --- LayerNorm over hidden dim (biased var, rsqrt, affine), whole block ---
    mu = jnp.mean(emb, axis=-1, keepdims=True)
    xc = emb - mu
    var = jnp.mean(xc * xc, axis=-1, keepdims=True)
    normed = xc * jax.lax.rsqrt(var + LN_EPS) * gamma + beta        # (BN, H)
    normed = normed.reshape(bblk, n, h)                             # (BBLK, N, H)

    # --- CFConv (batched): agg[b,i,:] = sum_j mask[b,i,j] * normed[b,j,:] ---
    m = mask_ref[...]                                               # (BBLK, N, N)
    if use_bf16_matmul:
        m = m.astype(jnp.bfloat16)
        normed_mm = normed.astype(jnp.bfloat16)
    else:
        normed_mm = normed
    agg = jax.lax.dot_general(
        m, normed_mm,
        dimension_numbers=(((2,), (1,)), ((0,), (0,))),             # bij,bjh->bih
        preferred_element_type=jnp.float32)                         # (BBLK, N, H)

    # --- residual add (f32) ---
    out_ref[...] = (s_ref[...] + agg).astype(out_ref.dtype)


def neighbor_emb_forward(z, s, mask, emb_weight, ln_gamma, ln_beta,
                         *, use_bf16_matmul=True, batch_block=None):
    """z: (B,N) int; s: (B,N,H) f32; mask: (B,N,N,1) f32; emb_weight: (MAX_Z,H)."""
    B, N = z.shape
    H = s.shape[-1]
    MAX_Z = emb_weight.shape[0]

    # Free re-layouts (no HBM copies): squeeze trailing dim-1, put z on sublanes.
    z3 = z.astype(jnp.int32).reshape(B, N, 1)
    mask3 = mask.reshape(B, N, N)
    gamma = ln_gamma.reshape(1, H)
    beta = ln_beta.reshape(1, H)

    # --- choose how many batches to pack per grid step ---
    if batch_block is None:
        per_batch_bytes = 4 * (N * N + 2 * N * H + N)        # mask + s + out + z
        budget = 8 * 1024 * 1024                              # ~2x w/ double-buffering
        bblk = max(1, min(B, budget // max(per_batch_bytes, 1)))
        bblk = min(bblk, 16)                                  # bound block size
        if B >= 2:
            bblk = min(bblk, B // 2)                          # keep >=2 pipeline steps
        bblk = max(bblk, 1)
        while B % bblk:                                       # avoid partial batch blocks
            bblk -= 1
    else:
        bblk = batch_block
    grid = (B // bblk,)

    flops = 2 * B * N * N * H + 2 * B * N * MAX_Z * H
    bytes_accessed = 4 * (B * N * N + 2 * B * N * H + B * N + MAX_Z * H + 2 * H)
    cost = pl.CostEstimate(flops=flops, transcendentals=B * N,
                           bytes_accessed=bytes_accessed)

    kernel = functools.partial(_neighbor_emb_kernel,
                               use_bf16_matmul=use_bf16_matmul)

    out = pl.pallas_call(
        kernel,
        out_shape=jax.ShapeDtypeStruct((B, N, H), s.dtype),
        grid_spec=pltpu.PrefetchScalarGridSpec(
            num_scalar_prefetch=0,
            grid=grid,
            in_specs=[
                pl.BlockSpec((bblk, N, 1), lambda g: (g, 0, 0)),   # z
                pl.BlockSpec((bblk, N, N), lambda g: (g, 0, 0)),   # mask
                pl.BlockSpec((bblk, N, H), lambda g: (g, 0, 0)),   # s
                pl.BlockSpec((MAX_Z, H), lambda g: (0, 0)),        # emb table
                pl.BlockSpec((1, H), lambda g: (0, 0)),            # gamma
                pl.BlockSpec((1, H), lambda g: (0, 0)),            # beta
            ],
            out_specs=pl.BlockSpec((bblk, N, H), lambda g: (g, 0, 0)),
        ),
        compiler_params=pltpu.CompilerParams(
            dimension_semantics=("parallel",),
            vmem_limit_bytes=32 * 1024 * 1024),
        cost_estimate=cost,
    )(z3, mask3, s, emb_weight, gamma, beta)
    return out


if __name__ == "__main__":
    # Small, module-consistent shapes; H=128 keeps output stores lane-dense.
    B, N, H, MAX_Z = 2, 8, 128, 10

    key = jax.random.PRNGKey(0)
    k_z, k_s, k_m, k_w = jax.random.split(key, 4)

    z = jax.random.randint(k_z, (B, N), 0, MAX_Z, dtype=jnp.int32)
    s = jax.random.normal(k_s, (B, N, H), dtype=jnp.float32)
    mask = jax.random.uniform(k_m, (B, N, N, 1), dtype=jnp.float32)

    # nn.Embedding ~ N(0,1) with padding_idx=0 row zeroed; LayerNorm gamma=1, beta=0.
    emb_weight = jax.random.normal(k_w, (MAX_Z, H), dtype=jnp.float32)
    emb_weight = emb_weight.at[0].set(0.0)
    ln_gamma = jnp.ones((H,), dtype=jnp.float32)
    ln_beta = jnp.zeros((H,), dtype=jnp.float32)

    # Pure-JAX reference.
    emb_ref = jnp.take(emb_weight, z, axis=0)
    mu = jnp.mean(emb_ref, axis=-1, keepdims=True)
    var = jnp.mean((emb_ref - mu) ** 2, axis=-1, keepdims=True)
    normed = (emb_ref - mu) / jnp.sqrt(var + LN_EPS) * ln_gamma + ln_beta
    ref = s + jnp.sum(mask * normed[:, None, :, :], axis=2)

    # Exact f32 path (tight tolerance).
    out_f32 = neighbor_emb_forward(z, s, mask, emb_weight, ln_gamma, ln_beta,
                                   use_bf16_matmul=False)
    jax.block_until_ready(out_f32)
    assert jnp.allclose(out_f32, ref, atol=1e-4, rtol=1e-4), "f32 mismatch vs reference"

    # bf16-MXU path (f32 accumulation) -- looser tolerance per numerics sign-off.
    out_bf16 = neighbor_emb_forward(z, s, mask, emb_weight, ln_gamma, ln_beta,
                                    use_bf16_matmul=True)
    jax.block_until_ready(out_bf16)
    assert jnp.allclose(out_bf16, ref, atol=5e-2, rtol=5e-2), "bf16 mismatch vs reference"

    print("KERNEL_OK")
</pallas_src>

<mosaic_0001>
module attributes {stable_mosaic.version = 11 : i64} {
  func.func @_neighbor_emb_kernel(%arg0: i32, %arg1: memref<1x8x1xi32, #tpu.memory_space<vmem>>, %arg2: memref<1x8x8xf32, #tpu.memory_space<vmem>>, %arg3: memref<1x8x128xf32, #tpu.memory_space<vmem>>, %arg4: memref<10x128xf32, #tpu.memory_space<vmem>>, %arg5: memref<1x128xf32, #tpu.memory_space<vmem>>, %arg6: memref<1x128xf32, #tpu.memory_space<vmem>>, %arg7: memref<1x8x128xf32, #tpu.memory_space<vmem>>) attributes {dimension_semantics = [#tpu.dimension_semantics<parallel>], iteration_bounds = array<i64: 2>, scalar_prefetch = 0 : i64, scratch_operands = 0 : i64, tpu.core_type = #tpu.core_type<tc>, window_params = [{transform_indices = @transform_0, window_bounds = array<i64: 1, 8, 1>}, {transform_indices = @transform_1, window_bounds = array<i64: 1, 8, 8>}, {transform_indices = @transform_2, window_bounds = array<i64: 1, 8, 128>}, {pipeline_mode = #tpu.pipeline_mode<synchronous>, transform_indices = @transform_3, window_bounds = array<i64: 10, 128>}, {pipeline_mode = #tpu.pipeline_mode<synchronous>, transform_indices = @transform_4, window_bounds = array<i64: 1, 128>}, {pipeline_mode = #tpu.pipeline_mode<synchronous>, transform_indices = @transform_5, window_bounds = array<i64: 1, 128>}, {transform_indices = @transform_6, window_bounds = array<i64: 1, 8, 128>}]} {
    %c0 = arith.constant 0 : index
    %c0_0 = arith.constant 0 : index
    %0 = vector.load %arg4[%c0, %c0_0] : memref<10x128xf32, #tpu.memory_space<vmem>>, vector<10x128xf32>
    %c0_1 = arith.constant 0 : index
    %c0_2 = arith.constant 0 : index
    %1 = vector.load %arg5[%c0_1, %c0_2] : memref<1x128xf32, #tpu.memory_space<vmem>>, vector<1x128xf32>
    %c0_3 = arith.constant 0 : index
    %c0_4 = arith.constant 0 : index
    %2 = vector.load %arg6[%c0_3, %c0_4] : memref<1x128xf32, #tpu.memory_space<vmem>>, vector<1x128xf32>
    %c0_5 = arith.constant 0 : index
    %c0_6 = arith.constant 0 : index
    %c0_7 = arith.constant 0 : index
    %3 = vector.load %arg1[%c0_5, %c0_6, %c0_7] : memref<1x8x1xi32, #tpu.memory_space<vmem>>, vector<1x8x1xi32>
    %4 = vector.shape_cast %3 : vector<1x8x1xi32> to vector<8x1xi32>
    %5 = tpu.iota {dimensions = array<i32: 1>} : vector<8x10xi32>
    %6 = vector.broadcast %4 : vector<8x1xi32> to vector<8x10xi32>
    %7 = arith.cmpi eq, %6, %5 : vector<8x10xi32>
    %8 = arith.extui %7 : vector<8x10xi1> to vector<8x10xi32>
    %9 = arith.sitofp %8 : vector<8x10xi32> to vector<8x10xf32>
    %cst = arith.constant dense<0.000000e+00> : vector<8x128xf32>
    %10 = tpu.matmul %9, %0, %cst {dimension_numbers = #tpu.dot_dimension_numbers<[1], [0], [0], [1], [0, 0, 1, 1], [], []>} : vector<8x10xf32>, vector<10x128xf32>, vector<8x128xf32> -> vector<8x128xf32>
    %cst_8 = arith.constant dense<0.000000e+00> : vector<8xf32>
    %11 = vector.multi_reduction <add>, %10, %cst_8 [1] : vector<8x128xf32> to vector<8xf32>
    %12 = vector.shape_cast %11 : vector<8xf32> to vector<8x1xf32>
    %cst_9 = arith.constant 1.280000e+02 : f32
    %13 = vector.broadcast %cst_9 : f32 to vector<8x1xf32>
    %14 = arith.divf %12, %13 : vector<8x1xf32>
    %15 = vector.broadcast %14 : vector<8x1xf32> to vector<8x128xf32>
    %16 = arith.subf %10, %15 : vector<8x128xf32>
    %17 = arith.mulf %16, %16 : vector<8x128xf32>
    %cst_10 = arith.constant dense<0.000000e+00> : vector<8xf32>
    %18 = vector.multi_reduction <add>, %17, %cst_10 [1] : vector<8x128xf32> to vector<8xf32>
    %19 = vector.shape_cast %18 : vector<8xf32> to vector<8x1xf32>
    %cst_11 = arith.constant 1.280000e+02 : f32
    %20 = vector.broadcast %cst_11 : f32 to vector<8x1xf32>
    %21 = arith.divf %19, %20 : vector<8x1xf32>
    %cst_12 = arith.constant 9.99999974E-6 : f32
    %22 = vector.broadcast %cst_12 : f32 to vector<8x1xf32>
    %23 = arith.addf %21, %22 : vector<8x1xf32>
    %24 = math.rsqrt %23 : vector<8x1xf32>
    %25 = vector.broadcast %24 : vector<8x1xf32> to vector<8x128xf32>
    %26 = arith.mulf %16, %25 : vector<8x128xf32>
    %27 = vector.broadcast %1 : vector<1x128xf32> to vector<8x128xf32>
    %28 = arith.mulf %26, %27 : vector<8x128xf32>
    %29 = vector.broadcast %2 : vector<1x128xf32> to vector<8x128xf32>
    %30 = arith.addf %28, %29 : vector<8x128xf32>
    %31 = vector.shape_cast %30 : vector<8x128xf32> to vector<1x8x128xf32>
    %c0_13 = arith.constant 0 : index
    %c0_14 = arith.constant 0 : index
    %c0_15 = arith.constant 0 : index
    %32 = vector.load %arg2[%c0_13, %c0_14, %c0_15] : memref<1x8x8xf32, #tpu.memory_space<vmem>>, vector<1x8x8xf32>
    %cst_16 = arith.constant dense<0.000000e+00> : vector<1x8x128xf32>
    %33 = tpu.matmul %32, %31, %cst_16 {dimension_numbers = #tpu.dot_dimension_numbers<[2], [1], [1], [2], [0, 0, 0, 1, 1, 2], [0], [0]>} : vector<1x8x8xf32>, vector<1x8x128xf32>, vector<1x8x128xf32> -> vector<1x8x128xf32>
    %c0_17 = arith.constant 0 : index
    %c0_18 = arith.constant 0 : index
    %c0_19 = arith.constant 0 : index
    %34 = vector.load %arg3[%c0_17, %c0_18, %c0_19] : memref<1x8x128xf32, #tpu.memory_space<vmem>>, vector<1x8x128xf32>
    %35 = arith.addf %34, %33 : vector<1x8x128xf32>
    %c0_20 = arith.constant 0 : index
    %c0_21 = arith.constant 0 : index
    %c0_22 = arith.constant 0 : index
    %36 = vector.load %arg7[%c0_20, %c0_21, %c0_22] : memref<1x8x128xf32, #tpu.memory_space<vmem>>, vector<1x8x128xf32>
    tpu.vector_store %arg7[%c0_20, %c0_21, %c0_22], %35 {strides = array<i32>} : memref<1x8x128xf32, #tpu.memory_space<vmem>>, vector<1x8x128xf32>,
    return
  }
  func.func @transform_0(%arg0: i32) -> (i32, i32, i32) {
    %c0_i32 = arith.constant 0 : i32
    %c0_i32_0 = arith.constant 0 : i32
    %c0_i32_1 = arith.constant 0 : i32
    return %arg0, %c0_i32, %c0_i32_0 : i32, i32, i32
  }
  func.func @transform_1(%arg0: i32) -> (i32, i32, i32) {
    %c0_i32 = arith.constant 0 : i32
    %c0_i32_0 = arith.constant 0 : i32
    %c0_i32_1 = arith.constant 0 : i32
    return %arg0, %c0_i32, %c0_i32_0 : i32, i32, i32
  }
  func.func @transform_2(%arg0: i32) -> (i32, i32, i32) {
    %c0_i32 = arith.constant 0 : i32
    %c0_i32_0 = arith.constant 0 : i32
    %c0_i32_1 = arith.constant 0 : i32
    return %arg0, %c0_i32, %c0_i32_0 : i32, i32, i32
  }
  func.func @transform_3(%arg0: i32) -> (i32, i32) {
    %c0_i32 = arith.constant 0 : i32
    %c0_i32_0 = arith.constant 0 : i32
    %c0_i32_1 = arith.constant 0 : i32
    return %c0_i32, %c0_i32_0 : i32, i32
  }
  func.func @transform_4(%arg0: i32) -> (i32, i32) {
    %c0_i32 = arith.constant 0 : i32
    %c0_i32_0 = arith.constant 0 : i32
    %c0_i32_1 = arith.constant 0 : i32
    return %c0_i32, %c0_i32_0 : i32, i32
  }
  func.func @transform_5(%arg0: i32) -> (i32, i32) {
    %c0_i32 = arith.constant 0 : i32
    %c0_i32_0 = arith.constant 0 : i32
    %c0_i32_1 = arith.constant 0 : i32
    return %c0_i32, %c0_i32_0 : i32, i32
  }
  func.func @transform_6(%arg0: i32) -> (i32, i32, i32) {
    %c0_i32 = arith.constant 0 : i32
    %c0_i32_0 = arith.constant 0 : i32
    %c0_i32_1 = arith.constant 0 : i32
    return %arg0, %c0_i32, %c0_i32_0 : i32, i32, i32
  }
}

</mosaic_0001>

<llo_original>
// kernel: tpu_custom_call.1
$region0: #{tpu_custom_call.1}
  #allocation0 [shape = 'u32[]', space=smem, size = 0x4, offset = 0x4, fixed_abs, tag = 'smem constant byte address 0x4 - core index']
  #allocation1 [shape = 'u32[144,128]{1,0:T(1,128)}', space=vmem, size = 0x12000, scoped, tag = 'internal scratch']
  %s0 = inlined_call_operand.vmem [shape: s32[2,8,1], index: 0, kind: input, shape index: {}]
  %s1 = inlined_call_operand.vmem [shape: f32[2,8,8], index: 1, kind: input, shape index: {}]
  %s2 = inlined_call_operand.hbm [shape: f32[2,8,128], index: 2, kind: input, shape index: {}]
  %s3 = inlined_call_operand.hbm [shape: f32[10,128], index: 3, kind: input, shape index: {}]
  %s4 = inlined_call_operand.vmem [shape: f32[1,128], index: 4, kind: input, shape index: {}]
  %s5 = inlined_call_operand.vmem [shape: f32[1,128], index: 5, kind: input, shape index: {}]
  %s6 = inlined_call_operand.hbm [shape: f32[2,8,128], index: 6, kind: output, shape index: {}]
  %s7 = sld [smem:[#allocation0]]
  $region65: #{tpu_custom_call.1} parent=0
    _
  %s9 = ssub.s32 1, %s7
  %s10 = scalar_select 0, %s9, %s7
  $region1: #{tpu_custom_call.1} parent=0
    #allocation2 [shape = 'u8[8192]{0}', space=vmem, size = 0x2000, scoped, tag = 'input window, operand 2']
    #allocation3 [shape = 's32[2]{0}', space=sflag, size = 0x8, scoped, tag = 'scoped memory for tpu_custom_call.1']
    #allocation4 [shape = 's32[2]{0}', space=sflag, size = 0x8, scoped, tag = 'scoped memory for tpu_custom_call.1']
    #allocation5 [shape = 'u8[8192]{0}', space=vmem, size = 0x2000, scoped, tag = 'input window, operand 3, single buffered']
    #allocation6 [shape = 's32[1]{0}', space=sflag, size = 0x4, scoped, tag = 'scoped memory for tpu_custom_call.1']
    #allocation7 [shape = 'u8[8192]{0}', space=vmem, size = 0x2000, scoped, tag = 'output window, operand 0']
    %11 = vsyncpa [#allocation3], 0
    %s12 = scalar_lea.sflag [#allocation3], 1
    %13 = vsyncpa %s12, 0
    %14 = vsyncpa [#allocation6], 0
    %15 = vsyncpa [#allocation4], 0
    %s16 = scalar_lea.sflag [#allocation4], 1
    %17 = vsyncpa %s16, 0
    loop: start=0, step=1, limit=4
    $region2: #{tpu_custom_call.1} parent=1 // loop_pre_header
      _
    $region3: #{tpu_custom_call.1} parent=1 // loop_header
      %s19 = sphi 0, %s23
      %p20 = scmp.ge.s32.totalorder %s19, 4
      %s29 = sphi 0, %s31
      %s32 = sphi 0, %s29
      %s33 = sphi 0, %s32
      %s49 = sphi 0, %s33
      %s55 = sphi 0, %s57
      %s58 = sphi 0, %s55
      %s59 = sphi 0, %s58
      %s75 = sphi 0, %s59
      %s81 = sphi 0, %s83
      %s84 = sphi 0, %s81
      %s85 = sphi 0, %s84
      %s101 = sphi 0, %s85
      %s105 = sphi 0, %s105
      %s107 = sphi 0, %s105
      %s108 = sphi 0, %s107
      %s122 = sphi 0, %s108
      %s126 = sphi 0, %s126
      %s128 = sphi 0, %s126
      %s129 = sphi 0, %s128
      %s143 = sphi 0, %s129
      %s147 = sphi 0, %s147
      %s149 = sphi 0, %s147
      %s150 = sphi 0, %s149
      %s164 = sphi 0, %s150
      %s170 = sphi 0, %s172
      %s173 = sphi 0, %s170
      %s174 = sphi 0, %s173
      %s190 = sphi 0, %s174
    $region4: #{tpu_custom_call.1} parent=1 // loop_header_branch
      %22 = sbr.rel (%p20) target = $region8
    $region5: #{tpu_custom_call.1} parent=1 // loop_body
      %s24 = ssub.s32 %s19, 1
      %s25 = ssub.s32 %s19, 2
      %s26 = sadd.s32 %s19, 1
      %s27 = ssub.s32 %s19, %s26
      %p28 = scmp.eq.s32.totalorder %s27, 0
      %s30 = sadd.s32 %s29, 1
      %s31 = scalar_select %p28, %s29, %s30
      %p34 = pneg %p28
      %p35 = scmp.eq.s32.totalorder %s19, 1
      %p36 = por %p34, %p35
      %p37 = scmp.ne.s32.totalorder %s29, %s32
      %p38 = scmp.eq.s32.totalorder %s19, 0
      %p39 = por %p37, %p38
      %p40 = scmp.ne.s32.totalorder %s29, %s32
      %p41 = scmp.eq.s32.totalorder %s24, 1
      %p42 = por %p40, %p41
      %p43 = scmp.ne.s32.totalorder %s32, %s33
      %p44 = scmp.eq.s32.totalorder %s24, 0
      %p45 = por %p43, %p44
      %p46 = scmp.ne.s32.totalorder %s32, %s33
      %p47 = scmp.eq.s32.totalorder %s25, 1
      %p48 = por %p46, %p47
      %p50 = scmp.ne.s32.totalorder %s33, %s49
      %p51 = scmp.eq.s32.totalorder %s25, 0
      %p52 = por %p50, %p51
      %s53 = ssub.s32 %s19, %s26
      %p54 = scmp.eq.s32.totalorder %s53, 0
      %s56 = sadd.s32 %s55, 1
      %s57 = scalar_select %p54, %s55, %s56
      %p60 = pneg %p54
      %p61 = scmp.eq.s32.totalorder %s19, 1
      %p62 = por %p60, %p61
      %p63 = scmp.ne.s32.totalorder %s55, %s58
      %p64 = scmp.eq.s32.totalorder %s19, 0
      %p65 = por %p63, %p64
      %p66 = scmp.ne.s32.totalorder %s55, %s58
      %p67 = scmp.eq.s32.totalorder %s24, 1
      %p68 = por %p66, %p67
      %p69 = scmp.ne.s32.totalorder %s58, %s59
      %p70 = scmp.eq.s32.totalorder %s24, 0
      %p71 = por %p69, %p70
      %p72 = scmp.ne.s32.totalorder %s58, %s59
      %p73 = scmp.eq.s32.totalorder %s25, 1
      %p74 = por %p72, %p73
      %p76 = scmp.ne.s32.totalorder %s59, %s75
      %p77 = scmp.eq.s32.totalorder %s25, 0
      %p78 = por %p76, %p77
      %s79 = ssub.s32 %s19, %s26
      %p80 = scmp.eq.s32.totalorder %s79, 0
      %s82 = sadd.s32 %s81, 1
      %s83 = scalar_select %p80, %s81, %s82
      %p86 = pneg %p80
      %p87 = scmp.eq.s32.totalorder %s19, 1
      %p88 = por %p86, %p87
      %p89 = scmp.ne.s32.totalorder %s81, %s84
      %p90 = scmp.eq.s32.totalorder %s19, 0
      %p91 = por %p89, %p90
      %p92 = scmp.ne.s32.totalorder %s81, %s84
      %p93 = scmp.eq.s32.totalorder %s24, 1
      %p94 = por %p92, %p93
      %p95 = scmp.ne.s32.totalorder %s84, %s85
      %p96 = scmp.eq.s32.totalorder %s24, 0
      %p97 = por %p95, %p96
      %p98 = scmp.ne.s32.totalorder %s84, %s85
      %p99 = scmp.eq.s32.totalorder %s25, 1
      %p100 = por %p98, %p99
      %p102 = scmp.ne.s32.totalorder %s85, %s101
      %p103 = scmp.eq.s32.totalorder %s25, 0
      %p104 = por %p102, %p103
      %s106 = sadd.s32 %s105, 1
      %p109 = scmp.eq.s32.totalorder %s19, 1
      %p110 = scmp.ne.s32.totalorder %s105, %s107
      %p111 = scmp.eq.s32.totalorder %s19, 0
      %p112 = por %p110, %p111
      %p113 = scmp.ne.s32.totalorder %s105, %s107
      %p114 = scmp.eq.s32.totalorder %s24, 1
      %p115 = por %p113, %p114
      %p116 = scmp.ne.s32.totalorder %s107, %s108
      %p117 = scmp.eq.s32.totalorder %s24, 0
      %p118 = por %p116, %p117
      %p119 = scmp.ne.s32.totalorder %s107, %s108
      %p120 = scmp.eq.s32.totalorder %s25, 1
      %p121 = por %p119, %p120
      %p123 = scmp.ne.s32.totalorder %s108, %s122
      %p124 = scmp.eq.s32.totalorder %s25, 0
      %p125 = por %p123, %p124
      %s127 = sadd.s32 %s126, 1
      %p130 = scmp.eq.s32.totalorder %s19, 1
      %p131 = scmp.ne.s32.totalorder %s126, %s128
      %p132 = scmp.eq.s32.totalorder %s19, 0
      %p133 = por %p131, %p132
      %p134 = scmp.ne.s32.totalorder %s126, %s128
      %p135 = scmp.eq.s32.totalorder %s24, 1
      %p136 = por %p134, %p135
      %p137 = scmp.ne.s32.totalorder %s128, %s129
      %p138 = scmp.eq.s32.totalorder %s24, 0
      %p139 = por %p137, %p138
      %p140 = scmp.ne.s32.totalorder %s128, %s129
      %p141 = scmp.eq.s32.totalorder %s25, 1
      %p142 = por %p140, %p141
      %p144 = scmp.ne.s32.totalorder %s129, %s143
      %p145 = scmp.eq.s32.totalorder %s25, 0
      %p146 = por %p144, %p145
      %s148 = sadd.s32 %s147, 1
      %p151 = scmp.eq.s32.totalorder %s19, 1
      %p152 = scmp.ne.s32.totalorder %s147, %s149
      %p153 = scmp.eq.s32.totalorder %s19, 0
      %p154 = por %p152, %p153
      %p155 = scmp.ne.s32.totalorder %s147, %s149
      %p156 = scmp.eq.s32.totalorder %s24, 1
      %p157 = por %p155, %p156
      %p158 = scmp.ne.s32.totalorder %s149, %s150
      %p159 = scmp.eq.s32.totalorder %s24, 0
      %p160 = por %p158, %p159
      %p161 = scmp.ne.s32.totalorder %s149, %s150
      %p162 = scmp.eq.s32.totalorder %s25, 1
      %p163 = por %p161, %p162
      %p165 = scmp.ne.s32.totalorder %s150, %s164
      %p166 = scmp.eq.s32.totalorder %s25, 0
      %p167 = por %p165, %p166
      %s168 = ssub.s32 %s19, %s26
      %p169 = scmp.eq.s32.totalorder %s168, 0
      %s171 = sadd.s32 %s170, 1
      %s172 = scalar_select %p169, %s170, %s171
      %p175 = pneg %p169
      %p176 = scmp.eq.s32.totalorder %s19, 1
      %p177 = por %p175, %p176
      %p178 = scmp.ne.s32.totalorder %s170, %s173
      %p179 = scmp.eq.s32.totalorder %s19, 0
      %p180 = por %p178, %p179
      %p181 = scmp.ne.s32.totalorder %s170, %s173
      %p182 = scmp.eq.s32.totalorder %s24, 1
      %p183 = por %p181, %p182
      %p184 = scmp.ne.s32.totalorder %s173, %s174
      %p185 = scmp.eq.s32.totalorder %s24, 0
      %p186 = por %p184, %p185
      %p187 = scmp.ne.s32.totalorder %s173, %s174
      %p188 = scmp.eq.s32.totalorder %s25, 1
      %p189 = por %p187, %p188
      %p191 = scmp.ne.s32.totalorder %s174, %s190
      %p192 = scmp.eq.s32.totalorder %s25, 0
      %p193 = por %p191, %p192
      %p194 = scmp.le.s32.totalorder 1, %s19
      %p195 = scmp.lt.s32.totalorder %s19, 3
      %p196 = pnand %p194, %p195
      %p197 = pneg %p196
      // Predicated region
      $region9: #{tpu_custom_call.1} parent=5 // pred_check
        _
      $region10: #{tpu_custom_call.1} parent=5 // pred_check_branch
        %199 = sbr.rel (%p196) target = $region12
      $region11: #{tpu_custom_call.1} parent=5 // pred_region
        %s200 = ssub.s32 %s19, 1
        // Predicated region
        $region13: #{tpu_custom_call.1} parent=11 // pred_check
          %p201 = pneg %p118
        $region14: #{tpu_custom_call.1} parent=11 // pred_check_branch
          %203 = sbr.rel (%p201) target = $region16
        $region15: #{tpu_custom_call.1} parent=11 // pred_region
          %s205 = ssub.s32 256, 256
          %206 = vsyncadd [#allocation6], %s205
          %s207 = sshll.u32 [#allocation5], 4
          %s208 = int_to_ptr.vmem [resolvable:$true] %s207
          %213 = dma.hbm_to_vmem [thread:$0]  %s3, 256, %s208, [#allocation6], 128, 128, 8
        $region16: #{tpu_custom_call.1} parent=11 // pred_fallthru
          _
        // Predicated region
        $region17: #{tpu_custom_call.1} parent=11 // pred_check
          %p214 = pneg %p139
        $region18: #{tpu_custom_call.1} parent=11 // pred_check_branch
          %216 = sbr.rel (%p214) target = $region20
        $region19: #{tpu_custom_call.1} parent=11 // pred_region
          _
        $region20: #{tpu_custom_call.1} parent=11 // pred_fallthru
          _
        // Predicated region
        $region21: #{tpu_custom_call.1} parent=11 // pred_check
          %p217 = pneg %p160
        $region22: #{tpu_custom_call.1} parent=11 // pred_check_branch
          %219 = sbr.rel (%p217) target = $region24
        $region23: #{tpu_custom_call.1} parent=11 // pred_region
          _
        $region24: #{tpu_custom_call.1} parent=11 // pred_fallthru
          _
      $region12: #{tpu_custom_call.1} parent=5 // pred_fallthru
        _
      %p220 = scmp.lt.s32.totalorder %s19, 2
      // Predicated region
      $region25: #{tpu_custom_call.1} parent=5 // pred_check
        %p221 = pneg %p220
      $region26: #{tpu_custom_call.1} parent=5 // pred_check_branch
        %223 = sbr.rel (%p221) target = $region28
      $region27: #{tpu_custom_call.1} parent=5 // pred_region
        // Predicated region
        $region29: #{tpu_custom_call.1} parent=27 // pred_check
          %p224 = pneg %p39
        $region30: #{tpu_custom_call.1} parent=27 // pred_check_branch
          %226 = sbr.rel (%p224) target = $region32
        $region31: #{tpu_custom_call.1} parent=27 // pred_region
          %p227 = scmp.lt.s32.totalorder %s19, 1
          %s228 = scalar_select %p227, %s19, 1
          %s229 = smul.addr %s228, 8
          %s230 = scalar_lea.vmem %s0, %s229
        $region32: #{tpu_custom_call.1} parent=27 // pred_fallthru
          _
        // Predicated region
        $region33: #{tpu_custom_call.1} parent=27 // pred_check
          %p231 = pneg %p65
        $region34: #{tpu_custom_call.1} parent=27 // pred_check_branch
          %233 = sbr.rel (%p231) target = $region36
        $region35: #{tpu_custom_call.1} parent=27 // pred_region
          %p234 = scmp.lt.s32.totalorder %s19, 1
          %s235 = scalar_select %p234, %s19, 1
          %s236 = smul.addr %s235, 8
          %s237 = scalar_lea.vmem %s1, %s236
        $region36: #{tpu_custom_call.1} parent=27 // pred_fallthru
          _
        // Predicated region
        $region37: #{tpu_custom_call.1} parent=27 // pred_check
          %p238 = pneg %p91
        $region38: #{tpu_custom_call.1} parent=27 // pred_check_branch
          %240 = sbr.rel (%p238) target = $region40
        $region39: #{tpu_custom_call.1} parent=27 // pred_region
          %s241 = sand.u32 %s81, 1
          %s242 = scalar_lea.sflag [#allocation3], %s241
          %s243 = sand.u32 %s81, 1
          %s244 = smul.addr %s243, 8
          %s245 = scalar_lea.vmem [#allocation2], %s244
          %s247 = ssub.s32 128, 128
          %248 = vsyncadd %s242, %s247
          %s249 = smul.addr %s19, 128
          %s250 = scalar_lea.hbm %s2, %s249
          %s252 = sshll.u32 %s245, 4
          %s253 = int_to_ptr.vmem [resolvable:$true] %s252
          %255 = dma.hbm_to_vmem [thread:$0]  %s250, 128, %s253, %s242
        $region40: #{tpu_custom_call.1} parent=27 // pred_fallthru
          _
      $region28: #{tpu_custom_call.1} parent=5 // pred_fallthru
        _
      %p256 = scmp.le.s32.totalorder 1, %s19
      %p257 = scmp.lt.s32.totalorder %s19, 3
      %p258 = pnand %p256, %p257
      %p259 = pneg %p258
      // Predicated region
      $region41: #{tpu_custom_call.1} parent=5 // pred_check
        _
      $region42: #{tpu_custom_call.1} parent=5 // pred_check_branch
        %261 = sbr.rel (%p258) target = $region44
      $region43: #{tpu_custom_call.1} parent=5 // pred_region
        %s262 = ssub.s32 %s19, 1
        %s263 = sand.u32 %s84, 1
        %s264 = scalar_lea.sflag [#allocation3], %s263
        %s265 = sand.u32 %s84, 1
        %s266 = smul.addr %s265, 8
        %s267 = scalar_lea.vmem [#allocation2], %s266
        // Predicated region
        $region45: #{tpu_custom_call.1} parent=43 // pred_check
          %p268 = pneg %p97
        $region46: #{tpu_custom_call.1} parent=43 // pred_check_branch
          %270 = sbr.rel (%p268) target = $region48
        $region47: #{tpu_custom_call.1} parent=43 // pred_region
          %271 = dma.done %s264, 128
        $region48: #{tpu_custom_call.1} parent=43 // pred_fallthru
          _
        // Predicated region
        $region49: #{tpu_custom_call.1} parent=43 // pred_check
          %p272 = pneg %p118
        $region50: #{tpu_custom_call.1} parent=43 // pred_check_branch
          %274 = sbr.rel (%p272) target = $region52
        $region51: #{tpu_custom_call.1} parent=43 // pred_region
          %275 = dma.done [#allocation6], 256
        $region52: #{tpu_custom_call.1} parent=43 // pred_fallthru
          _
        %p276 = scmp.lt.s32.totalorder %s24, 1
        %s277 = scalar_select %p276, %s24, 1
        %s278 = smul.addr %s277, 8
        %s279 = scalar_lea.vmem %s0, %s278
        %p280 = pneg %p45
        %p281 = pneg %p42
        %p282 = scmp.lt.s32.totalorder %s24, 1
        %s283 = scalar_select %p282, %s24, 1
        %s284 = smul.addr %s283, 8
        %s285 = scalar_lea.vmem %s1, %s284
        %p286 = pneg %p71
        %p287 = pneg %p68
        %s288 = sand.u32 %s84, 1
        %s289 = scalar_lea.sflag [#allocation3], %s288
        %s290 = sand.u32 %s84, 1
        %s291 = smul.addr %s290, 8
        %s292 = scalar_lea.vmem [#allocation2], %s291
        %p293 = pneg %p97
        %p294 = pneg %p94
        %p295 = pneg %p118
        %p296 = pneg %p115
        %p297 = pneg %p139
        %p298 = pneg %p136
        %p299 = pneg %p160
        %p300 = pneg %p157
        %p301 = pneg %p186
        %p302 = pneg %p183
        %s303 = sand.u32 %s173, 1
        %s304 = scalar_lea.sflag [#allocation4], %s303
        %s305 = sand.u32 %s173, 1
        %s306 = smul.addr %s305, 8
        %s307 = scalar_lea.vmem [#allocation7], %s306
        %p308 = scmp.lt.s32.totalorder %s24, 1
        %s309 = scalar_select %p308, %s24, 1
        %s310 = smul.addr %s309, 8
        %s311 = scalar_lea.vmem %s0, %s310
        %p312 = scmp.lt.s32.totalorder %s24, 1
        %s313 = scalar_select %p312, %s24, 1
        %s314 = smul.addr %s313, 8
        %s315 = scalar_lea.vmem %s1, %s314
        %v316 = vld [vmem:[#allocation5] sm:$0xff]
        %v317 = vld [vmem:[#allocation5 + $0x8] sm:$0x3]
        %v318 = vld [vmem:[%s4] sm:$0x1]
        %v319 = vld [vmem:[%s5] sm:$0x1]
        %v320 = vld [vmem:[%s311] sm:$0xff]
        %v321 = vlaneseq
        %v322 = vand.u32 %v321, 127
        %323 = vset.pattern.permute.xlu0 0
        %324 = vperm.xlu0 %323, %v320
        %v325 = vpop.permute.xlu0 %324
        %vm326 = vcmp.eq.s32.totalorder %v325, %v322
        %v327 = vsel %vm326, 1, 0
        %v328 = vcvt.s32.f32 %v327
        %vm329 = vcmask 80896
        %v331 = vsel %vm329, %v328, 0
        %vm333 = vcmask 1041408
        %v335 = vsel %vm333, %v317, 0
        %337 = vmatprep.subr.mxu0 0.0
        %338 = vmatpush1.msra.mxu0 %v316
        %339 = vmatprep.subr.mxu0 0.0
        %340 = vmatpush1.msra.mxu0 %v335
        %341 = vmatprep.subr.mxu0 0.0
        %342 = vmatpush1.msra.mxu0 0.0
        %343 = vmatprep.subr.mxu0 0.0
        %344 = vmatpush1.msra.mxu0 0.0
        %345 = vmatprep.subr.mxu0 0.0
        %346 = vmatpush1.msra.mxu0 0.0
        %347 = vmatprep.subr.mxu0 0.0
        %348 = vmatpush1.msra.mxu0 0.0
        %349 = vmatprep.subr.mxu0 0.0
        %350 = vmatpush1.msra.mxu0 0.0
        %351 = vmatprep.subr.mxu0 0.0
        %352 = vmatpush1.msra.mxu0 0.0
        %353 = vmatprep.subr.mxu0 0.0
        %354 = vmatpush1.msra.mxu0 0.0
        %355 = vmatprep.subr.mxu0 0.0
        %356 = vmatpush1.msra.mxu0 0.0
        %357 = vmatprep.subr.mxu0 0.0
        %358 = vmatpush1.msra.mxu0 0.0
        %359 = vmatprep.subr.mxu0 0.0
        %360 = vmatpush1.msra.mxu0 0.0
        %361 = vmatprep.subr.mxu0 0.0
        %362 = vmatpush1.msra.mxu0 0.0
        %363 = vmatprep.subr.mxu0 0.0
        %364 = vmatpush1.msra.mxu0 0.0
        %365 = vmatprep.subr.mxu0 0.0
        %366 = vmatpush1.msra.mxu0 0.0
        %367 = vmatprep.subr.mxu0 0.0
        %368 = vmatpush1.msra.mxu0 0.0
        %369 = vmatprep.subr.mxu0 0.0
        %370 = vmatpush1.msra.mxu0 0.0
        %371 = vmatprep.subr.mxu0 0.0
        %372 = vmatpush1.msra.mxu0 0.0
        %373 = vmatprep.subr.mxu0 0.0
        %374 = vmatpush1.msra.mxu0 0.0
        %375 = vmatprep.subr.mxu0 0.0
        %376 = vmatpush1.msra.mxu0 0.0
        %377 = vmatprep.subr.mxu0 0.0
        %378 = vmatpush1.msra.mxu0 0.0
        %379 = vmatprep.subr.mxu0 0.0
        %380 = vmatpush1.msra.mxu0 0.0
        %381 = vmatprep.subr.mxu0 0.0
        %382 = vmatpush1.msra.mxu0 0.0
        %383 = vmatprep.subr.mxu0 0.0
        %384 = vmatpush1.msra.mxu0 0.0
        %385 = vmatprep.subr.mxu0 0.0
        %386 = vmatpush1.msra.mxu0 0.0
        %387 = vmatprep.subr.mxu0 0.0
        %388 = vmatpush1.msra.mxu0 0.0
        %389 = vmatprep.subr.mxu0 0.0
        %390 = vmatpush1.msra.mxu0 0.0
        %391 = vmatprep.subr.mxu0 0.0
        %392 = vmatpush1.msra.mxu0 0.0
        %393 = vmatprep.subr.mxu0 0.0
        %394 = vmatpush1.msra.mxu0 0.0
        %395 = vmatprep.subr.mxu0 0.0
        %396 = vmatpush1.msra.mxu0 0.0
        %397 = vmatprep.subr.mxu0 0.0
        %398 = vmatpush1.msra.mxu0 0.0
        %399 = vmatprep.subr.mxu0 0.0
        %400 = vmatpush1.msra.mxu0 0.0
        %401 = vmatprep.mubr.f32.mxu0 0.0
        %402 = vmatmul.mubr.f32.gmra.mrb[0].mxu0 %v331
        %v403 = vpop.f32.mrb[0].mxu0
        %v404 = vadd.f32 0.0, %v403
        %v405 = vpop.f32.mrb[0].mxu0
        %406 = vdwg.mxu0
        %407 = vadd.xlane.f32.xlu0 %v404
        %v408 = vpop.xlane.xlu0 %407
        %v409 = vrcp.pop 128.0
        %v410 = vmul.f32 %v408, %v409
        %v411 = vsub.f32 %v404, %v410
        %v412 = vmul.f32 %v411, %v411
        %413 = vadd.xlane.f32.xlu0 %v412
        %v414 = vpop.xlane.xlu0 %413
        %v415 = vmul.f32 %v414, %v409
        %v416 = vadd.f32 %v415, 1e-05
        %v417 = vrsqrt.pop %v416
        %v418 = vmul.f32 %v411, %v417
        %v420 = vlaneseq
        %v421 = vshrl.u32 %v420, 7
        %v422 = vsub.s32 0, %v421
        %v423 = vrot.slane %v318, %v422
        %v425 = vmul.f32 %v418, %v423
        %v427 = vlaneseq
        %v428 = vshrl.u32 %v427, 7
        %v429 = vsub.s32 0, %v428
        %v430 = vrot.slane %v319, %v429
        %v432 = vadd.f32 %v425, %v430
        %v433 = vld [vmem:[%s315] sm:$0xff]
        %vm434 = vcmask 64512
        %v436 = vsel %vm434, %v433, 0
        %438 = vmatprep.subr.mxu0 0.0
        %439 = vmatpush1.msra.mxu0 %v432
        %440 = vmatprep.subr.mxu0 0.0
        %441 = vmatpush1.msra.mxu0 0.0
        %442 = vmatprep.subr.mxu0 0.0
        %443 = vmatpush1.msra.mxu0 0.0
        %444 = vmatprep.subr.mxu0 0.0
        %445 = vmatpush1.msra.mxu0 0.0
        %446 = vmatprep.subr.mxu0 0.0
        %447 = vmatpush1.msra.mxu0 0.0
        %448 = vmatprep.subr.mxu0 0.0
        %449 = vmatpush1.msra.mxu0 0.0
        %450 = vmatprep.subr.mxu0 0.0
        %451 = vmatpush1.msra.mxu0 0.0
        %452 = vmatprep.subr.mxu0 0.0
        %453 = vmatpush1.msra.mxu0 0.0
        %454 = vmatprep.subr.mxu0 0.0
        %455 = vmatpush1.msra.mxu0 0.0
        %456 = vmatprep.subr.mxu0 0.0
        %457 = vmatpush1.msra.mxu0 0.0
        %458 = vmatprep.subr.mxu0 0.0
        %459 = vmatpush1.msra.mxu0 0.0
        %460 = vmatprep.subr.mxu0 0.0
        %461 = vmatpush1.msra.mxu0 0.0
        %462 = vmatprep.subr.mxu0 0.0
        %463 = vmatpush1.msra.mxu0 0.0
        %464 = vmatprep.subr.mxu0 0.0
        %465 = vmatpush1.msra.mxu0 0.0
        %466 = vmatprep.subr.mxu0 0.0
        %467 = vmatpush1.msra.mxu0 0.0
        %468 = vmatprep.subr.mxu0 0.0
        %469 = vmatpush1.msra.mxu0 0.0
        %470 = vmatprep.subr.mxu0 0.0
        %471 = vmatpush1.msra.mxu0 0.0
        %472 = vmatprep.subr.mxu0 0.0
        %473 = vmatpush1.msra.mxu0 0.0
        %474 = vmatprep.subr.mxu0 0.0
        %475 = vmatpush1.msra.mxu0 0.0
        %476 = vmatprep.subr.mxu0 0.0
        %477 = vmatpush1.msra.mxu0 0.0
        %478 = vmatprep.subr.mxu0 0.0
        %479 = vmatpush1.msra.mxu0 0.0
        %480 = vmatprep.subr.mxu0 0.0
        %481 = vmatpush1.msra.mxu0 0.0
        %482 = vmatprep.subr.mxu0 0.0
        %483 = vmatpush1.msra.mxu0 0.0
        %484 = vmatprep.subr.mxu0 0.0
        %485 = vmatpush1.msra.mxu0 0.0
        %486 = vmatprep.subr.mxu0 0.0
        %487 = vmatpush1.msra.mxu0 0.0
        %488 = vmatprep.subr.mxu0 0.0
        %489 = vmatpush1.msra.mxu0 0.0
        %490 = vmatprep.subr.mxu0 0.0
        %491 = vmatpush1.msra.mxu0 0.0
        %492 = vmatprep.subr.mxu0 0.0
        %493 = vmatpush1.msra.mxu0 0.0
        %494 = vmatprep.subr.mxu0 0.0
        %495 = vmatpush1.msra.mxu0 0.0
        %496 = vmatprep.subr.mxu0 0.0
        %497 = vmatpush1.msra.mxu0 0.0
        %498 = vmatprep.subr.mxu0 0.0
        %499 = vmatpush1.msra.mxu0 0.0
        %500 = vmatprep.subr.mxu0 0.0
        %501 = vmatpush1.msra.mxu0 0.0
        %502 = vmatprep.mubr.f32.mxu0 0.0
        %503 = vmatmul.mubr.f32.gmra.mrb[0].mxu0 %v436
        %v504 = vpop.f32.mrb[0].mxu0
        %v505 = vadd.f32 0.0, %v504
        %v506 = vpop.f32.mrb[0].mxu0
        %507 = vdwg.mxu0
        %v508 = vld [vmem:[%s267] sm:$0xff]
        %v509 = vadd.f32 %v508, %v505
        %510 = vst [vmem:[%s307] sm:$0xff] %v509
        %s511 = sand.u32 %s173, 1
        %s512 = scalar_lea.sflag [#allocation4], %s511
        %s513 = sand.u32 %s173, 1
        %s514 = smul.addr %s513, 8
        %s515 = scalar_lea.vmem [#allocation7], %s514
        // Predicated region
        $region53: #{tpu_custom_call.1} parent=43 // pred_check
          %p516 = pneg %p183
        $region54: #{tpu_custom_call.1} parent=43 // pred_check_branch
          %518 = sbr.rel (%p516) target = $region56
        $region55: #{tpu_custom_call.1} parent=43 // pred_region
          %s520 = ssub.s32 128, 128
          %521 = vsyncadd %s512, %s520
          %s522 = smul.addr %s24, 128
          %s523 = scalar_lea.hbm %s6, %s522
          %s525 = sshll.u32 %s515, 4
          %s526 = int_to_ptr.vmem [resolvable:$true] %s525
          %528 = dma.vmem_to_hbm [thread:$0]  %s526, 128, %s523, %s512
        $region56: #{tpu_custom_call.1} parent=43 // pred_fallthru
          _
      $region44: #{tpu_custom_call.1} parent=5 // pred_fallthru
        _
      %p529 = scmp.le.s32.totalorder 2, %s19
      // Predicated region
      $region57: #{tpu_custom_call.1} parent=5 // pred_check
        %p530 = pneg %p529
      $region58: #{tpu_custom_call.1} parent=5 // pred_check_branch
        %532 = sbr.rel (%p530) target = $region60
      $region59: #{tpu_custom_call.1} parent=5 // pred_region
        %s533 = ssub.s32 %s19, 2
        // Predicated region
        $region61: #{tpu_custom_call.1} parent=59 // pred_check
          %p534 = pneg %p189
        $region62: #{tpu_custom_call.1} parent=59 // pred_check_branch
          %536 = sbr.rel (%p534) target = $region64
        $region63: #{tpu_custom_call.1} parent=59 // pred_region
          %s537 = sand.u32 %s174, 1
          %s538 = scalar_lea.sflag [#allocation4], %s537
          %s539 = sand.u32 %s174, 1
          %s540 = smul.addr %s539, 8
          %s541 = scalar_lea.vmem [#allocation7], %s540
          %542 = dma.done %s538, 128
        $region64: #{tpu_custom_call.1} parent=59 // pred_fallthru
          _
      $region60: #{tpu_custom_call.1} parent=5 // pred_fallthru
        _
    $region6: #{tpu_custom_call.1} parent=1 // loop_footer
      %s23 = sadd.s32 1, %s19
    $region7: #{tpu_custom_call.1} parent=1 // loop_footer_branch
      %18 = sbr.rel target = $region3
    $region8: #{tpu_custom_call.1} parent=1 // loop_exit
      _
    %543 = vsyncpa [#allocation3], 1
    %s544 = scalar_lea.sflag [#allocation3], 1
    %545 = vsyncpa %s544, 1
    %546 = vsyncpa [#allocation6], 1
    %547 = vsyncpa [#allocation4], 1
    %s548 = scalar_lea.sflag [#allocation4], 1
    %549 = vsyncpa %s548, 1

</llo_original>
